<compile_context>
chip_gen: v6e
topology: v6e:2x2x1
jax: 0.10.0
libtpu: 0.0.40
codegen_flags: <defaults>
</compile_context>

<pallas_src>
import functools

import jax
import jax.numpy as jnp
from jax.experimental import pallas as pl
from jax.experimental.pallas import tpu as pltpu


def _round_up(n, m):
    return ((n + m - 1) // m) * m


def _pick_row_tile(n_pad):
    """Largest row tile (multiple of 128 dividing n_pad) with adj tile <= 8 MiB bf16."""
    budget = 8 * 1024 * 1024
    for t in (512, 256, 128):
        if n_pad % t == 0 and t * n_pad * 2 <= budget:
            return t
    return 128


def _gin_stack_kernel(eps_ref, x_ref, adj_ref, w_ref, b_ref, o_ref,
                      x_cur, z_scr, *, out_channels, tm):
    l = pl.program_id(0)            # layer index
    i = pl.program_id(1)            # adjacency row-tile index
    n_layers = pl.num_programs(0)

    # ---- layer prologue: z = x_layer @ W_l for ALL rows, computed once per layer ----
    @pl.when(i == 0)
    def _layer_start():
        @pl.when(l == 0)
        def _init_x():
            x_cur[...] = x_ref[...]
        z_scr[...] = jnp.dot(
            x_cur[...], w_ref[...],
            preferred_element_type=jnp.float32).astype(jnp.bfloat16)

    # ---- GIN aggregation for this row tile, reassociated: (1+eps)*z + adj@z + b ----
    row0 = pl.multiple_of(i * tm, tm)
    z_tile = z_scr[pl.ds(row0, tm), :].astype(jnp.float32)
    agg = jnp.dot(adj_ref[...], z_scr[...], preferred_element_type=jnp.float32)
    eps = eps_ref[l]
    y = (1.0 + eps) * z_tile + agg + b_ref[...]

    # hidden layers: ReLU (+ dropout no-op at inference), feed next layer via VMEM
    @pl.when(l < n_layers - 1)
    def _hidden():
        y_relu = jnp.maximum(y, 0.0)
        x_cur[pl.ds(row0, tm), :] = y_relu.astype(jnp.bfloat16)
        o_ref[...] = y_relu

    # last layer: log_softmax over the real (unpadded) out_channels lanes
    @pl.when(l == n_layers - 1)
    def _last():
        col = jax.lax.broadcasted_iota(jnp.int32, y.shape, 1)
        ym = jnp.where(col < out_channels, y, -1e30)
        m = jnp.max(ym, axis=-1, keepdims=True)
        s = ym - m
        lse = jnp.log(jnp.sum(jnp.exp(s), axis=-1, keepdims=True))
        o_ref[...] = s - lse


def gin_forward(params, x, adj):
    """Fused forward pass of the whole GIN stack in one pallas_call."""
    ws, bs, epss = params["w"], params["b"], params["eps"]
    num_layers = len(ws)
    n, in_c = x.shape
    out_dims = [w.shape[0] for w in ws]
    out_c = out_dims[-1]

    c_pad = _round_up(max([in_c] + out_dims + [128]), 128)
    n_pad = _round_up(max(n, 128), 128)
    tm = _pick_row_tile(n_pad)

    # ---- pad + cast inputs (bf16 MXU feed; adj entries 0/1 are exact in bf16) ----
    xp = jnp.zeros((n_pad, c_pad), jnp.bfloat16).at[:n, :in_c].set(
        x.astype(jnp.bfloat16))
    adjp = jnp.zeros((n_pad, n_pad), jnp.bfloat16).at[:n, :n].set(
        adj.astype(jnp.bfloat16))

    # ---- stack + pad params; weights stored pre-transposed as (Cin, Cout) ----
    w_all = jnp.zeros((num_layers, c_pad, c_pad), jnp.bfloat16)
    b_all = jnp.zeros((num_layers, 1, c_pad), jnp.float32)
    for l, (w, b) in enumerate(zip(ws, bs)):
        co, ci = w.shape
        w_all = w_all.at[l, :ci, :co].set(w.T.astype(jnp.bfloat16))
        b_all = b_all.at[l, 0, :co].set(b.reshape(-1).astype(jnp.float32))
    eps_all = jnp.concatenate([e.reshape(1) for e in epss]).astype(jnp.float32)

    kernel = functools.partial(_gin_stack_kernel, out_channels=out_c, tm=tm)

    out = pl.pallas_call(
        kernel,
        out_shape=jax.ShapeDtypeStruct((n_pad, c_pad), jnp.float32),
        grid_spec=pltpu.PrefetchScalarGridSpec(
            num_scalar_prefetch=0,
            grid=(num_layers, n_pad // tm),
            in_specs=[
                pl.BlockSpec(memory_space=pltpu.MemorySpace.SMEM),           # eps (L,)
                pl.BlockSpec((n_pad, c_pad), lambda l, i: (0, 0)),           # x  (whole)
                pl.BlockSpec((tm, n_pad), lambda l, i: (i, 0)),              # adj row tile
                pl.BlockSpec((None, c_pad, c_pad), lambda l, i: (l, 0, 0)),  # W_l
                pl.BlockSpec((None, 1, c_pad), lambda l, i: (l, 0, 0)),      # b_l
            ],
            out_specs=pl.BlockSpec((tm, c_pad), lambda l, i: (i, 0)),
            scratch_shapes=[
                pltpu.VMEM((n_pad, c_pad), jnp.bfloat16),   # x_cur: layer activations
                pltpu.VMEM((n_pad, c_pad), jnp.bfloat16),   # z_scr: x @ W for this layer
            ],
        ),
        compiler_params=pltpu.CompilerParams(
            dimension_semantics=("arbitrary", "arbitrary"),
            vmem_limit_bytes=64 * 1024 * 1024,
        ),
    )(eps_all, xp, adjp, w_all, b_all)

    return out[:n, :out_c]


def init_gin_params(key, in_channels, hidden_channels, out_channels, num_layers):
    """Deterministic parameter init matching the module's layer shapes (torch conv.)."""
    dims = [in_channels] + [hidden_channels] * (num_layers - 1) + [out_channels]
    ws, bs, epss = [], [], []
    for l in range(num_layers):
        fan_in, fan_out = dims[l], dims[l + 1]
        key, kw, kb = jax.random.split(key, 3)
        scale = 1.0 / jnp.sqrt(jnp.float32(fan_in))
        ws.append(jax.random.uniform(kw, (fan_out, fan_in), jnp.float32,
                                     minval=-scale, maxval=scale))
        bs.append(jax.random.uniform(kb, (1, fan_out), jnp.float32,
                                     minval=-scale, maxval=scale))
        # GINConv(train_eps=True) initializes eps to 0.0
        epss.append(jnp.zeros((1,), jnp.float32))
    return {"w": ws, "b": bs, "eps": epss}


def gin_reference(params, x, adj):
    """Pure-JAX f32 reference matching the PyTorch module's forward."""
    h = x
    num_layers = len(params["w"])
    for l in range(num_layers):
        w, b, eps = params["w"][l], params["b"][l], params["eps"][l]
        h = (1.0 + eps[0]) * h + adj @ h
        h = h @ w.T + b
        if l < num_layers - 1:
            h = jnp.maximum(h, 0.0)
    m = jnp.max(h, axis=-1, keepdims=True)
    s = h - m
    return s - jnp.log(jnp.sum(jnp.exp(s), axis=-1, keepdims=True))


if __name__ == "__main__":
    key = jax.random.PRNGKey(0)
    N = 128               # number of graph nodes
    in_channels = 16
    hidden_channels = 32
    out_channels = 8
    num_layers = 3

    key, kx, ka, kp = jax.random.split(key, 4)
    x = jax.random.normal(kx, (N, in_channels), jnp.float32)
    # random dense adjacency (0/1), no self loops
    adj = (jax.random.uniform(ka, (N, N)) < 0.05).astype(jnp.float32)
    adj = adj * (1.0 - jnp.eye(N, dtype=jnp.float32))

    params = init_gin_params(kp, in_channels, hidden_channels, out_channels, num_layers)

    out = gin_forward(params, x, adj)
    jax.block_until_ready(out)

    assert out.shape == (N, out_channels)
    # log_softmax rows should sum (in prob space) to ~1
    assert jnp.allclose(jnp.sum(jnp.exp(out), axis=-1), 1.0, atol=1e-3)
    # compare against f32 reference (bf16 MXU feed -> loose tolerance)
    ref = gin_reference(params, x, adj)
    max_err = float(jnp.max(jnp.abs(out - ref)))
    assert max_err < 0.5, f"max abs err vs reference: {max_err}"
    print("KERNEL_OK")
</pallas_src>

<mosaic_0001>
module attributes {stable_mosaic.version = 11 : i64} {
  func.func @_gin_stack_kernel(%arg0: i32, %arg1: i32, %arg2: memref<3xf32, #tpu.memory_space<smem>>, %arg3: memref<128x128xbf16, #tpu.memory_space<vmem>>, %arg4: memref<128x128xbf16, #tpu.memory_space<vmem>>, %arg5: memref<1x128x128xbf16, #tpu.memory_space<vmem>>, %arg6: memref<1x1x128xf32, #tpu.memory_space<vmem>>, %arg7: memref<128x128xf32, #tpu.memory_space<vmem>>, %arg8: memref<128x128xbf16, #tpu.memory_space<vmem>>, %arg9: memref<128x128xbf16, #tpu.memory_space<vmem>>) attributes {dimension_semantics = [#tpu.dimension_semantics<arbitrary>, #tpu.dimension_semantics<arbitrary>], iteration_bounds = array<i64: 3, 1>, scalar_prefetch = 0 : i64, scratch_operands = 2 : i64, tpu.core_type = #tpu.core_type<tc>, window_params = [{transform_indices = @transform_0, window_bounds = array<i64: 3>}, {pipeline_mode = #tpu.pipeline_mode<synchronous>, transform_indices = @transform_1, window_bounds = array<i64: 128, 128>}, {transform_indices = @transform_2, window_bounds = array<i64: 128, 128>}, {transform_indices = @transform_3, window_bounds = array<i64: 1, 128, 128>}, {transform_indices = @transform_4, window_bounds = array<i64: 1, 1, 128>}, {transform_indices = @transform_5, window_bounds = array<i64: 128, 128>}]} {
    %c0_i32 = arith.constant 0 : i32
    %0 = arith.cmpi eq, %arg1, %c0_i32 : i32
    %1 = arith.extui %0 : i1 to i32
    %c0_i32_0 = arith.constant 0 : i32
    %2 = arith.cmpi ne, %1, %c0_i32_0 : i32
    scf.if %2 {
      %c0_i32_12 = arith.constant 0 : i32
      %27 = arith.cmpi eq, %arg0, %c0_i32_12 : i32
      %28 = arith.extui %27 : i1 to i32
      %c0_i32_13 = arith.constant 0 : i32
      %29 = arith.cmpi ne, %28, %c0_i32_13 : i32
      scf.if %29 {
        %c0_22 = arith.constant 0 : index
        %c0_23 = arith.constant 0 : index
        %36 = vector.load %arg3[%c0_22, %c0_23] : memref<128x128xbf16, #tpu.memory_space<vmem>>, vector<128x128xbf16>
        %c0_24 = arith.constant 0 : index
        %c0_25 = arith.constant 0 : index
        %37 = vector.load %arg8[%c0_24, %c0_25] : memref<128x128xbf16, #tpu.memory_space<vmem>>, vector<128x128xbf16>
        tpu.vector_store %arg8[%c0_24, %c0_25], %36 {strides = array<i32>} : memref<128x128xbf16, #tpu.memory_space<vmem>>, vector<128x128xbf16>,
      } else {
      }
      %c0_14 = arith.constant 0 : index
      %c0_15 = arith.constant 0 : index
      %30 = vector.load %arg8[%c0_14, %c0_15] : memref<128x128xbf16, #tpu.memory_space<vmem>>, vector<128x128xbf16>
      %c0_16 = arith.constant 0 : index
      %c0_17 = arith.constant 0 : index
      %c0_18 = arith.constant 0 : index
      %31 = vector.load %arg5[%c0_16, %c0_17, %c0_18] : memref<1x128x128xbf16, #tpu.memory_space<vmem>>, vector<1x128x128xbf16>
      %32 = vector.shape_cast %31 : vector<1x128x128xbf16> to vector<128x128xbf16>
      %cst_19 = arith.constant dense<0.000000e+00> : vector<128x128xf32>
      %33 = tpu.matmul %30, %32, %cst_19 {dimension_numbers = #tpu.dot_dimension_numbers<[1], [0], [0], [1], [0, 0, 1, 1], [], []>} : vector<128x128xbf16>, vector<128x128xbf16>, vector<128x128xf32> -> vector<128x128xf32>
      %34 = arith.truncf %33 : vector<128x128xf32> to vector<128x128xbf16>
      %c0_20 = arith.constant 0 : index
      %c0_21 = arith.constant 0 : index
      %35 = vector.load %arg9[%c0_20, %c0_21] : memref<128x128xbf16, #tpu.memory_space<vmem>>, vector<128x128xbf16>
      tpu.vector_store %arg9[%c0_20, %c0_21], %34 {strides = array<i32>} : memref<128x128xbf16, #tpu.memory_space<vmem>>, vector<128x128xbf16>,
    } else {
    }
    %c128_i32 = arith.constant 128 : i32
    %3 = arith.muli %arg1, %c128_i32 : i32
    %4 = tpu.assume_multiple %3, 128 : i32
    %5 = arith.index_cast %4 : i32 to index
    %c0 = arith.constant 0 : index
    %6 = vector.load %arg9[%5, %c0] : memref<128x128xbf16, #tpu.memory_space<vmem>>, vector<128x128xbf16>
    %7 = arith.extf %6 : vector<128x128xbf16> to vector<128x128xf32>
    %c0_1 = arith.constant 0 : index
    %c0_2 = arith.constant 0 : index
    %8 = vector.load %arg4[%c0_1, %c0_2] : memref<128x128xbf16, #tpu.memory_space<vmem>>, vector<128x128xbf16>
    %c0_3 = arith.constant 0 : index
    %c0_4 = arith.constant 0 : index
    %9 = vector.load %arg9[%c0_3, %c0_4] : memref<128x128xbf16, #tpu.memory_space<vmem>>, vector<128x128xbf16>
    %cst = arith.constant dense<0.000000e+00> : vector<128x128xf32>
    %10 = tpu.matmul %8, %9, %cst {dimension_numbers = #tpu.dot_dimension_numbers<[1], [0], [0], [1], [0, 0, 1, 1], [], []>} : vector<128x128xbf16>, vector<128x128xbf16>, vector<128x128xf32> -> vector<128x128xf32>
    %11 = arith.index_cast %arg0 : i32 to index
    %12 = memref.load %arg2[%11] : memref<3xf32, #tpu.memory_space<smem>>
    %cst_5 = arith.constant 1.000000e+00 : f32
    %13 = arith.addf %cst_5, %12 : f32
    %14 = vector.broadcast %13 : f32 to vector<128x128xf32>
    %15 = arith.mulf %14, %7 : vector<128x128xf32>
    %16 = arith.addf %15, %10 : vector<128x128xf32>
    %c0_6 = arith.constant 0 : index
    %c0_7 = arith.constant 0 : index
    %c0_8 = arith.constant 0 : index
    %17 = vector.load %arg6[%c0_6, %c0_7, %c0_8] : memref<1x1x128xf32, #tpu.memory_space<vmem>>, vector<1x1x128xf32>
    %18 = vector.shape_cast %17 : vector<1x1x128xf32> to vector<1x128xf32>
    %19 = vector.broadcast %18 : vector<1x128xf32> to vector<128x128xf32>
    %20 = arith.addf %16, %19 : vector<128x128xf32>
    %c2_i32 = arith.constant 2 : i32
    %21 = arith.cmpi slt, %arg0, %c2_i32 : i32
    %22 = arith.extui %21 : i1 to i32
    %c0_i32_9 = arith.constant 0 : i32
    %23 = arith.cmpi ne, %22, %c0_i32_9 : i32
    scf.if %23 {
      %cst_12 = arith.constant 0.000000e+00 : f32
      %27 = vector.broadcast %cst_12 : f32 to vector<128x128xf32>
      %28 = arith.maximumf %20, %27 : vector<128x128xf32>
      %29 = arith.truncf %28 : vector<128x128xf32> to vector<128x128xbf16>
      %30 = arith.index_cast %4 : i32 to index
      %c0_13 = arith.constant 0 : index
      %31 = vector.load %arg8[%30, %c0_13] : memref<128x128xbf16, #tpu.memory_space<vmem>>, vector<128x128xbf16>
      tpu.vector_store %arg8[%30, %c0_13], %29 {strides = array<i32>} : memref<128x128xbf16, #tpu.memory_space<vmem>>, vector<128x128xbf16>,
      %c0_14 = arith.constant 0 : index
      %c0_15 = arith.constant 0 : index
      %32 = vector.load %arg7[%c0_14, %c0_15] : memref<128x128xf32, #tpu.memory_space<vmem>>, vector<128x128xf32>
      tpu.vector_store %arg7[%c0_14, %c0_15], %28 {strides = array<i32>} : memref<128x128xf32, #tpu.memory_space<vmem>>, vector<128x128xf32>,
    } else {
    }
    %c2_i32_10 = arith.constant 2 : i32
    %24 = arith.cmpi eq, %arg0, %c2_i32_10 : i32
    %25 = arith.extui %24 : i1 to i32
    %c0_i32_11 = arith.constant 0 : i32
    %26 = arith.cmpi ne, %25, %c0_i32_11 : i32
    scf.if %26 {
      %27 = tpu.iota {dimensions = array<i32: 1>} : vector<128x128xi32>
      %c8_i32 = arith.constant 8 : i32
      %28 = vector.broadcast %c8_i32 : i32 to vector<128x128xi32>
      %29 = arith.cmpi slt, %27, %28 : vector<128x128xi32>
      %cst_12 = arith.constant -1.000000e+30 : f32
      %30 = vector.broadcast %cst_12 : f32 to vector<128x128xf32>
      %31 = arith.select %29, %20, %30 : vector<128x128xi1>, vector<128x128xf32>
      %cst_13 = arith.constant dense<0xFF800000> : vector<128xf32>
      %32 = vector.multi_reduction <maximumf>, %31, %cst_13 [1] : vector<128x128xf32> to vector<128xf32>
      %33 = vector.shape_cast %32 : vector<128xf32> to vector<128x1xf32>
      %34 = vector.broadcast %33 : vector<128x1xf32> to vector<128x128xf32>
      %35 = arith.subf %31, %34 : vector<128x128xf32>
      %36 = math.exp %35 : vector<128x128xf32>
      %cst_14 = arith.constant dense<0.000000e+00> : vector<128xf32>
      %37 = vector.multi_reduction <add>, %36, %cst_14 [1] : vector<128x128xf32> to vector<128xf32>
      %38 = vector.shape_cast %37 : vector<128xf32> to vector<128x1xf32>
      %39 = math.log %38 : vector<128x1xf32>
      %40 = vector.broadcast %39 : vector<128x1xf32> to vector<128x128xf32>
      %41 = arith.subf %35, %40 : vector<128x128xf32>
      %c0_15 = arith.constant 0 : index
      %c0_16 = arith.constant 0 : index
      %42 = vector.load %arg7[%c0_15, %c0_16] : memref<128x128xf32, #tpu.memory_space<vmem>>, vector<128x128xf32>
      tpu.vector_store %arg7[%c0_15, %c0_16], %41 {strides = array<i32>} : memref<128x128xf32, #tpu.memory_space<vmem>>, vector<128x128xf32>,
    } else {
    }
    return
  }
  func.func @transform_0(%arg0: i32, %arg1: i32) -> i32 {
    %c0_i32 = arith.constant 0 : i32
    %c0_i32_0 = arith.constant 0 : i32
    return %c0_i32 : i32
  }
  func.func @transform_1(%arg0: i32, %arg1: i32) -> (i32, i32) {
    %c0_i32 = arith.constant 0 : i32
    %c0_i32_0 = arith.constant 0 : i32
    %c0_i32_1 = arith.constant 0 : i32
    return %c0_i32, %c0_i32_0 : i32, i32
  }
  func.func @transform_2(%arg0: i32, %arg1: i32) -> (i32, i32) {
    %c0_i32 = arith.constant 0 : i32
    %c0_i32_0 = arith.constant 0 : i32
    return %arg1, %c0_i32 : i32, i32
  }
  func.func @transform_3(%arg0: i32, %arg1: i32) -> (i32, i32, i32) {
    %c0_i32 = arith.constant 0 : i32
    %c0_i32_0 = arith.constant 0 : i32
    %c0_i32_1 = arith.constant 0 : i32
    return %arg0, %c0_i32, %c0_i32_0 : i32, i32, i32
  }
  func.func @transform_4(%arg0: i32, %arg1: i32) -> (i32, i32, i32) {
    %c0_i32 = arith.constant 0 : i32
    %c0_i32_0 = arith.constant 0 : i32
    %c0_i32_1 = arith.constant 0 : i32
    return %arg0, %c0_i32, %c0_i32_0 : i32, i32, i32
  }
  func.func @transform_5(%arg0: i32, %arg1: i32) -> (i32, i32) {
    %c0_i32 = arith.constant 0 : i32
    %c0_i32_0 = arith.constant 0 : i32
    return %arg1, %c0_i32 : i32, i32
  }
}

</mosaic_0001>

<llo_original>
// kernel: tpu_custom_call.1
$region0: #{tpu_custom_call.1}
  #allocation0 [shape = 'u32[]', space=smem, size = 0x4, offset = 0x4, fixed_abs, tag = 'smem constant byte address 0x4 - core index']
  #allocation1 [shape = 'u32[144,128]{1,0:T(1,128)}', space=vmem, size = 0x12000, scoped, tag = 'internal scratch']
  #allocation2 [shape = 'bf16[128,128]{1,0:T(8,128)(2,1)}', space=vmem, size = 0x8000, scoped, tag = 'scratch operand']
  #allocation3 [shape = 'bf16[128,128]{1,0:T(8,128)(2,1)}', space=vmem, size = 0x8000, scoped, tag = 'scratch operand']
  %s0 = inlined_call_operand.hbm [shape: f32[3], index: 0, kind: input, shape index: {}]
  %s1 = inlined_call_operand.hbm [shape: bf16[128,128], index: 1, kind: input, shape index: {}]
  %s2 = inlined_call_operand.hbm [shape: bf16[128,128], index: 2, kind: input, shape index: {}]
  %s3 = inlined_call_operand.hbm [shape: bf16[3,128,128], index: 3, kind: input, shape index: {}]
  %s4 = inlined_call_operand.vmem [shape: f32[3,1,128], index: 4, kind: input, shape index: {}]
  %s5 = inlined_call_operand.hbm [shape: f32[128,128], index: 5, kind: output, shape index: {}]
  %s6 = sld [smem:[#allocation0]]
  $region85: #{tpu_custom_call.1} parent=0
    _
  %s8 = ssub.s32 1, %s6
  %s9 = scalar_select 0, %s8, %s6
  $region1: #{tpu_custom_call.1} parent=0
    #allocation4 [shape = 'u8[512]{0}', space=smem, size = 0x200, scoped, tag = 'input window, operand 0, single buffered']
    #allocation5 [shape = 's32[2]{0}', space=sflag, size = 0x8, scoped, tag = 'scoped memory for tpu_custom_call.1']
    #allocation6 [shape = 's32[2]{0}', space=sflag, size = 0x8, scoped, tag = 'scoped memory for tpu_custom_call.1']
    #allocation7 [shape = 's32[2]{0}', space=sflag, size = 0x8, scoped, tag = 'scoped memory for tpu_custom_call.1']
    #allocation8 [shape = 'u8[32768]{0}', space=vmem, size = 0x8000, scoped, tag = 'input window, operand 1, single buffered']
    #allocation9 [shape = 'u8[32768]{0}', space=vmem, size = 0x8000, scoped, tag = 'input window, operand 2, single buffered']
    #allocation10 [shape = 's32[1]{0}', space=sflag, size = 0x4, scoped, tag = 'scoped memory for tpu_custom_call.1']
    #allocation11 [shape = 'u8[65536]{0}', space=vmem, size = 0x10000, scoped, tag = 'input window, operand 3']
    #allocation12 [shape = 'u8[65536]{0}', space=vmem, size = 0x10000, scoped, tag = 'output window, operand 0, single buffered']
    %10 = vsyncpa [#allocation7], 0
    %11 = vsyncpa [#allocation5], 0
    %12 = vsyncpa [#allocation10], 0
    %13 = vsyncpa [#allocation6], 0
    loop: start=0, step=1, limit=5
    $region2: #{tpu_custom_call.1} parent=1 // loop_pre_header
      _
    $region3: #{tpu_custom_call.1} parent=1 // loop_header
      %s15 = sphi 0, %s19
      %p16 = scmp.ge.s32.totalorder %s15, 5
      %s22 = sphi 0, %s34
      %s23 = sphi 0, %s30
      %s24 = sphi 0, %s22
      %s25 = sphi 0, %s23
      %s26 = sphi 0, %s24
      %s27 = sphi 0, %s25
      %s35 = sphi 0, %s35
      %s37 = sphi 0, %s35
      %s38 = sphi 0, %s37
      %s52 = sphi 0, %s38
      %s56 = sphi 0, %s56
      %s58 = sphi 0, %s56
      %s59 = sphi 0, %s58
      %s73 = sphi 0, %s59
      %s79 = sphi 0, %s81
      %s82 = sphi 0, %s79
      %s83 = sphi 0, %s82
      %s99 = sphi 0, %s83
      %s105 = sphi 0, %s107
      %s108 = sphi 0, %s105
      %s109 = sphi 0, %s108
      %s125 = sphi 0, %s109
      %s131 = sphi 0, %s133
      %s134 = sphi 0, %s131
      %s135 = sphi 0, %s134
      %s151 = sphi 0, %s135
      %s157 = sphi 0, %s159
      %s160 = sphi 0, %s157
      %s161 = sphi 0, %s160
      %s177 = sphi 0, %s161
    $region4: #{tpu_custom_call.1} parent=1 // loop_header_branch
      %18 = sbr.rel (%p16) target = $region8
    $region5: #{tpu_custom_call.1} parent=1 // loop_body
      %s20 = ssub.s32 %s15, 1
      %s21 = ssub.s32 %s15, 2
      %s28 = sadd.s32 1, %s23
      %p29 = scmp.ge.s32.totalorder %s28, 1
      %s30 = scalar_select %p29, 0, %s28
      %s31 = sadd.s32 1, %s22
      %s32 = scalar_select %p29, %s31, %s22
      %p33 = scmp.ge.s32.totalorder %s32, 3
      %s34 = scalar_select %p33, 0, %s32
      %s36 = sadd.s32 %s35, 1
      %p39 = scmp.eq.s32.totalorder %s15, 2
      %p40 = scmp.ne.s32.totalorder %s35, %s37
      %p41 = scmp.eq.s32.totalorder %s15, 0
      %p42 = por %p40, %p41
      %p43 = scmp.ne.s32.totalorder %s35, %s37
      %p44 = scmp.eq.s32.totalorder %s20, 2
      %p45 = por %p43, %p44
      %p46 = scmp.ne.s32.totalorder %s37, %s38
      %p47 = scmp.eq.s32.totalorder %s20, 0
      %p48 = por %p46, %p47
      %p49 = scmp.ne.s32.totalorder %s37, %s38
      %p50 = scmp.eq.s32.totalorder %s21, 2
      %p51 = por %p49, %p50
      %p53 = scmp.ne.s32.totalorder %s38, %s52
      %p54 = scmp.eq.s32.totalorder %s21, 0
      %p55 = por %p53, %p54
      %s57 = sadd.s32 %s56, 1
      %p60 = scmp.eq.s32.totalorder %s15, 2
      %p61 = scmp.ne.s32.totalorder %s56, %s58
      %p62 = scmp.eq.s32.totalorder %s15, 0
      %p63 = por %p61, %p62
      %p64 = scmp.ne.s32.totalorder %s56, %s58
      %p65 = scmp.eq.s32.totalorder %s20, 2
      %p66 = por %p64, %p65
      %p67 = scmp.ne.s32.totalorder %s58, %s59
      %p68 = scmp.eq.s32.totalorder %s20, 0
      %p69 = por %p67, %p68
      %p70 = scmp.ne.s32.totalorder %s58, %s59
      %p71 = scmp.eq.s32.totalorder %s21, 2
      %p72 = por %p70, %p71
      %p74 = scmp.ne.s32.totalorder %s59, %s73
      %p75 = scmp.eq.s32.totalorder %s21, 0
      %p76 = por %p74, %p75
      %s77 = ssub.s32 %s23, %s30
      %p78 = scmp.eq.s32.totalorder %s77, 0
      %s80 = sadd.s32 %s79, 1
      %s81 = scalar_select %p78, %s79, %s80
      %p84 = pneg %p78
      %p85 = scmp.eq.s32.totalorder %s15, 2
      %p86 = por %p84, %p85
      %p87 = scmp.ne.s32.totalorder %s79, %s82
      %p88 = scmp.eq.s32.totalorder %s15, 0
      %p89 = por %p87, %p88
      %p90 = scmp.ne.s32.totalorder %s79, %s82
      %p91 = scmp.eq.s32.totalorder %s20, 2
      %p92 = por %p90, %p91
      %p93 = scmp.ne.s32.totalorder %s82, %s83
      %p94 = scmp.eq.s32.totalorder %s20, 0
      %p95 = por %p93, %p94
      %p96 = scmp.ne.s32.totalorder %s82, %s83
      %p97 = scmp.eq.s32.totalorder %s21, 2
      %p98 = por %p96, %p97
      %p100 = scmp.ne.s32.totalorder %s83, %s99
      %p101 = scmp.eq.s32.totalorder %s21, 0
      %p102 = por %p100, %p101
      %s103 = ssub.s32 %s22, %s34
      %p104 = scmp.eq.s32.totalorder %s103, 0
      %s106 = sadd.s32 %s105, 1
      %s107 = scalar_select %p104, %s105, %s106
      %p110 = pneg %p104
      %p111 = scmp.eq.s32.totalorder %s15, 2
      %p112 = por %p110, %p111
      %p113 = scmp.ne.s32.totalorder %s105, %s108
      %p114 = scmp.eq.s32.totalorder %s15, 0
      %p115 = por %p113, %p114
      %p116 = scmp.ne.s32.totalorder %s105, %s108
      %p117 = scmp.eq.s32.totalorder %s20, 2
      %p118 = por %p116, %p117
      %p119 = scmp.ne.s32.totalorder %s108, %s109
      %p120 = scmp.eq.s32.totalorder %s20, 0
      %p121 = por %p119, %p120
      %p122 = scmp.ne.s32.totalorder %s108, %s109
      %p123 = scmp.eq.s32.totalorder %s21, 2
      %p124 = por %p122, %p123
      %p126 = scmp.ne.s32.totalorder %s109, %s125
      %p127 = scmp.eq.s32.totalorder %s21, 0
      %p128 = por %p126, %p127
      %s129 = ssub.s32 %s22, %s34
      %p130 = scmp.eq.s32.totalorder %s129, 0
      %s132 = sadd.s32 %s131, 1
      %s133 = scalar_select %p130, %s131, %s132
      %p136 = pneg %p130
      %p137 = scmp.eq.s32.totalorder %s15, 2
      %p138 = por %p136, %p137
      %p139 = scmp.ne.s32.totalorder %s131, %s134
      %p140 = scmp.eq.s32.totalorder %s15, 0
      %p141 = por %p139, %p140
      %p142 = scmp.ne.s32.totalorder %s131, %s134
      %p143 = scmp.eq.s32.totalorder %s20, 2
      %p144 = por %p142, %p143
      %p145 = scmp.ne.s32.totalorder %s134, %s135
      %p146 = scmp.eq.s32.totalorder %s20, 0
      %p147 = por %p145, %p146
      %p148 = scmp.ne.s32.totalorder %s134, %s135
      %p149 = scmp.eq.s32.totalorder %s21, 2
      %p150 = por %p148, %p149
      %p152 = scmp.ne.s32.totalorder %s135, %s151
      %p153 = scmp.eq.s32.totalorder %s21, 0
      %p154 = por %p152, %p153
      %s155 = ssub.s32 %s23, %s30
      %p156 = scmp.eq.s32.totalorder %s155, 0
      %s158 = sadd.s32 %s157, 1
      %s159 = scalar_select %p156, %s157, %s158
      %p162 = pneg %p156
      %p163 = scmp.eq.s32.totalorder %s15, 2
      %p164 = por %p162, %p163
      %p165 = scmp.ne.s32.totalorder %s157, %s160
      %p166 = scmp.eq.s32.totalorder %s15, 0
      %p167 = por %p165, %p166
      %p168 = scmp.ne.s32.totalorder %s157, %s160
      %p169 = scmp.eq.s32.totalorder %s20, 2
      %p170 = por %p168, %p169
      %p171 = scmp.ne.s32.totalorder %s160, %s161
      %p172 = scmp.eq.s32.totalorder %s20, 0
      %p173 = por %p171, %p172
      %p174 = scmp.ne.s32.totalorder %s160, %s161
      %p175 = scmp.eq.s32.totalorder %s21, 2
      %p176 = por %p174, %p175
      %p178 = scmp.ne.s32.totalorder %s161, %s177
      %p179 = scmp.eq.s32.totalorder %s21, 0
      %p180 = por %p178, %p179
      %p181 = scmp.le.s32.totalorder 1, %s15
      %p182 = scmp.lt.s32.totalorder %s15, 4
      %p183 = pnand %p181, %p182
      %p184 = pneg %p183
      // Predicated region
      $region9: #{tpu_custom_call.1} parent=5 // pred_check
        _
      $region10: #{tpu_custom_call.1} parent=5 // pred_check_branch
        %186 = sbr.rel (%p183) target = $region12
      $region11: #{tpu_custom_call.1} parent=5 // pred_region
        %s187 = ssub.s32 %s15, 1
        // Predicated region
        $region13: #{tpu_custom_call.1} parent=11 // pred_check
          %p188 = pneg %p48
        $region14: #{tpu_custom_call.1} parent=11 // pred_check_branch
          %190 = sbr.rel (%p188) target = $region16
        $region15: #{tpu_custom_call.1} parent=11 // pred_region
          %s192 = ssub.s32 16, 16
          %193 = vsyncadd [#allocation7], %s192
          %196 = dma.hbm_to_smem %s0, 16, [#allocation4], [#allocation7]
        $region16: #{tpu_custom_call.1} parent=11 // pred_fallthru
          _
        // Predicated region
        $region17: #{tpu_custom_call.1} parent=11 // pred_check
          %p197 = pneg %p69
        $region18: #{tpu_custom_call.1} parent=11 // pred_check_branch
          %199 = sbr.rel (%p197) target = $region20
        $region19: #{tpu_custom_call.1} parent=11 // pred_region
          %s201 = ssub.s32 1024, 1024
          %202 = vsyncadd [#allocation5], %s201
          %s203 = sshll.u32 [#allocation8], 4
          %s204 = int_to_ptr.vmem [resolvable:$true] %s203
          %209 = dma.hbm_to_vmem [thread:$0]  %s1, 1024, %s204, [#allocation5], 64, 64, 4
        $region20: #{tpu_custom_call.1} parent=11 // pred_fallthru
          _
        // Predicated region
        $region21: #{tpu_custom_call.1} parent=11 // pred_check
          %p210 = pneg %p95
        $region22: #{tpu_custom_call.1} parent=11 // pred_check_branch
          %212 = sbr.rel (%p210) target = $region24
        $region23: #{tpu_custom_call.1} parent=11 // pred_region
          %s213 = smul.u32 16, %s25
          %s215 = ssub.s32 1024, 1024
          %216 = vsyncadd [#allocation10], %s215
          %s217 = smul.addr %s213, 64
          %s218 = scalar_lea.hbm %s2, %s217
          %s219 = sshll.u32 [#allocation9], 4
          %s220 = int_to_ptr.vmem [resolvable:$true] %s219
          %225 = dma.hbm_to_vmem [thread:$0]  %s218, 1024, %s220, [#allocation10], 64, 64, 4
        $region24: #{tpu_custom_call.1} parent=11 // pred_fallthru
          _
      $region12: #{tpu_custom_call.1} parent=5 // pred_fallthru
        _
      %p226 = scmp.lt.s32.totalorder %s15, 3
      // Predicated region
      $region25: #{tpu_custom_call.1} parent=5 // pred_check
        %p227 = pneg %p226
      $region26: #{tpu_custom_call.1} parent=5 // pred_check_branch
        %229 = sbr.rel (%p227) target = $region28
      $region27: #{tpu_custom_call.1} parent=5 // pred_region
        // Predicated region
        $region29: #{tpu_custom_call.1} parent=27 // pred_check
          %p230 = pneg %p115
        $region30: #{tpu_custom_call.1} parent=27 // pred_check_branch
          %232 = sbr.rel (%p230) target = $region32
        $region31: #{tpu_custom_call.1} parent=27 // pred_region
          %s233 = sand.u32 %s15, 1
          %s234 = scalar_lea.sflag [#allocation5], %s233
          %s235 = sand.u32 %s105, 1
          %s236 = smul.addr %s235, 64
          %s237 = scalar_lea.vmem [#allocation11], %s236
          %s239 = ssub.s32 1024, 1024
          %240 = vsyncadd %s234, %s239
          %s241 = smul.addr %s22, 16
          %s242 = smul.addr %s241, 64
          %s243 = scalar_lea.hbm %s3, %s242
          %s244 = sshll.u32 %s237, 4
          %s245 = int_to_ptr.vmem [resolvable:$true] %s244
          %250 = dma.hbm_to_vmem [thread:$0]  %s243, 1024, %s245, %s234, 64, 64, 4
        $region32: #{tpu_custom_call.1} parent=27 // pred_fallthru
          _
        // Predicated region
        $region33: #{tpu_custom_call.1} parent=27 // pred_check
          %p251 = pneg %p141
        $region34: #{tpu_custom_call.1} parent=27 // pred_check_branch
          %253 = sbr.rel (%p251) target = $region36
        $region35: #{tpu_custom_call.1} parent=27 // pred_region
          %p254 = scmp.lt.s32.totalorder %s22, 2
          %s255 = scalar_select %p254, %s22, 2
          %s256 = scalar_lea.vmem %s4, %s255
        $region36: #{tpu_custom_call.1} parent=27 // pred_fallthru
          _
      $region28: #{tpu_custom_call.1} parent=5 // pred_fallthru
        _
      %p257 = scmp.le.s32.totalorder 1, %s15
      %p258 = scmp.lt.s32.totalorder %s15, 4
      %p259 = pnand %p257, %p258
      %p260 = pneg %p259
      // Predicated region
      $region37: #{tpu_custom_call.1} parent=5 // pred_check
        _
      $region38: #{tpu_custom_call.1} parent=5 // pred_check_branch
        %262 = sbr.rel (%p259) target = $region40
      $region39: #{tpu_custom_call.1} parent=5 // pred_region
        %s263 = ssub.s32 %s15, 1
        // Predicated region
        $region41: #{tpu_custom_call.1} parent=39 // pred_check
          %p264 = pneg %p48
        $region42: #{tpu_custom_call.1} parent=39 // pred_check_branch
          %266 = sbr.rel (%p264) target = $region44
        $region43: #{tpu_custom_call.1} parent=39 // pred_region
          %267 = dma.done [#allocation7], 16
        $region44: #{tpu_custom_call.1} parent=39 // pred_fallthru
          _
        // Predicated region
        $region45: #{tpu_custom_call.1} parent=39 // pred_check
          %p268 = pneg %p69
        $region46: #{tpu_custom_call.1} parent=39 // pred_check_branch
          %270 = sbr.rel (%p268) target = $region48
        $region47: #{tpu_custom_call.1} parent=39 // pred_region
          %271 = dma.done [#allocation5], 1024
        $region48: #{tpu_custom_call.1} parent=39 // pred_fallthru
          _
        // Predicated region
        $region49: #{tpu_custom_call.1} parent=39 // pred_check
          %p272 = pneg %p95
        $region50: #{tpu_custom_call.1} parent=39 // pred_check_branch
          %274 = sbr.rel (%p272) target = $region52
        $region51: #{tpu_custom_call.1} parent=39 // pred_region
          %275 = dma.done [#allocation10], 1024
        $region52: #{tpu_custom_call.1} parent=39 // pred_fallthru
          _
        %s276 = sand.u32 %s20, 1
        %s277 = scalar_lea.sflag [#allocation5], %s276
        %s278 = sand.u32 %s108, 1
        %s279 = smul.addr %s278, 64
        %s280 = scalar_lea.vmem [#allocation11], %s279
        // Predicated region
        $region53: #{tpu_custom_call.1} parent=39 // pred_check
          %p281 = pneg %p121
        $region54: #{tpu_custom_call.1} parent=39 // pred_check_branch
          %283 = sbr.rel (%p281) target = $region56
        $region55: #{tpu_custom_call.1} parent=39 // pred_region
          %284 = dma.done %s277, 1024
        $region56: #{tpu_custom_call.1} parent=39 // pred_fallthru
          _
        %285 = sfence
        %p286 = pneg %p48
        %p287 = pneg %p45
        %p288 = pneg %p69
        %p289 = pneg %p66
        %p290 = pneg %p95
        %p291 = pneg %p92
        %s292 = sand.u32 %s20, 1
        %s293 = scalar_lea.sflag [#allocation5], %s292
        %s294 = sand.u32 %s108, 1
        %s295 = smul.addr %s294, 64
        %s296 = scalar_lea.vmem [#allocation11], %s295
        %p297 = pneg %p121
        %p298 = pneg %p118
        %p299 = scmp.lt.s32.totalorder %s24, 2
        %s300 = scalar_select %p299, %s24, 2
        %s301 = scalar_lea.vmem %s4, %s300
        %p302 = pneg %p147
        %p303 = pneg %p144
        %p304 = pneg %p173
        %p305 = pneg %p170
        %s306 = smul.u32 16, %s25
        %p307 = scmp.lt.s32.totalorder %s24, 2
        %s308 = scalar_select %p307, %s24, 2
        %s309 = scalar_lea.vmem %s4, %s308
        %s310 = smul.u32 16, %s25
        %p312 = scmp.eq.s32.totalorder %s25, 0
        // Predicated region
        $region57: #{tpu_custom_call.1} parent=39 // pred_check
          %p313 = pneg %p312
        $region58: #{tpu_custom_call.1} parent=39 // pred_check_branch
          %315 = sbr.rel (%p313) target = $region60
        $region59: #{tpu_custom_call.1} parent=39 // pred_region
          %p316 = scmp.eq.s32.totalorder %s24, 0
          // Predicated region
          $region61: #{tpu_custom_call.1} parent=59 // pred_check
            %p317 = pneg %p316
          $region62: #{tpu_custom_call.1} parent=59 // pred_check_branch
            %319 = sbr.rel (%p317) target = $region64
          $region63: #{tpu_custom_call.1} parent=59 // pred_region
            %v320 = vld [vmem:[#allocation8] sm:$0xf]
            %v321 = vld [vmem:[#allocation8 + $0x4] sm:$0xf]
            %v322 = vld [vmem:[#allocation8 + $0x8] sm:$0xf]
            %v323 = vld [vmem:[#allocation8 + $0xc] sm:$0xf]
            %v324 = vld [vmem:[#allocation8 + $0x10] sm:$0xf]
            %v325 = vld [vmem:[#allocation8 + $0x14] sm:$0xf]
            %v326 = vld [vmem:[#allocation8 + $0x18] sm:$0xf]
            %v327 = vld [vmem:[#allocation8 + $0x1c] sm:$0xf]
            %v328 = vld [vmem:[#allocation8 + $0x20] sm:$0xf]
            %v329 = vld [vmem:[#allocation8 + $0x24] sm:$0xf]
            %v330 = vld [vmem:[#allocation8 + $0x28] sm:$0xf]
            %v331 = vld [vmem:[#allocation8 + $0x2c] sm:$0xf]
            %v332 = vld [vmem:[#allocation8 + $0x30] sm:$0xf]
            %v333 = vld [vmem:[#allocation8 + $0x34] sm:$0xf]
            %v334 = vld [vmem:[#allocation8 + $0x38] sm:$0xf]
            %v335 = vld [vmem:[#allocation8 + $0x3c] sm:$0xf]
            %336 = vst [vmem:[#allocation2] sm:$0xf] %v320
            %337 = vst [vmem:[#allocation2 + $0x4] sm:$0xf] %v321
            %338 = vst [vmem:[#allocation2 + $0x8] sm:$0xf] %v322
            %339 = vst [vmem:[#allocation2 + $0xc] sm:$0xf] %v323
            %340 = vst [vmem:[#allocation2 + $0x10] sm:$0xf] %v324
            %341 = vst [vmem:[#allocation2 + $0x14] sm:$0xf] %v325
            %342 = vst [vmem:[#allocation2 + $0x18] sm:$0xf] %v326
            %343 = vst [vmem:[#allocation2 + $0x1c] sm:$0xf] %v327
            %344 = vst [vmem:[#allocation2 + $0x20] sm:$0xf] %v328
            %345 = vst [vmem:[#allocation2 + $0x24] sm:$0xf] %v329
            %346 = vst [vmem:[#allocation2 + $0x28] sm:$0xf] %v330
            %347 = vst [vmem:[#allocation2 + $0x2c] sm:$0xf] %v331
            %348 = vst [vmem:[#allocation2 + $0x30] sm:$0xf] %v332
            %349 = vst [vmem:[#allocation2 + $0x34] sm:$0xf] %v333
            %350 = vst [vmem:[#allocation2 + $0x38] sm:$0xf] %v334
            %351 = vst [vmem:[#allocation2 + $0x3c] sm:$0xf] %v335
          $region64: #{tpu_custom_call.1} parent=59 // pred_fallthru
            _
          %v352 = vld [vmem:[#allocation2] sm:$0xf]
          %v353 = vld [vmem:[#allocation2 + $0x4] sm:$0xf]
          %v354 = vld [vmem:[#allocation2 + $0x8] sm:$0xf]
          %v355 = vld [vmem:[#allocation2 + $0xc] sm:$0xf]
          %v356 = vld [vmem:[#allocation2 + $0x10] sm:$0xf]
          %v357 = vld [vmem:[#allocation2 + $0x14] sm:$0xf]
          %v358 = vld [vmem:[#allocation2 + $0x18] sm:$0xf]
          %v359 = vld [vmem:[#allocation2 + $0x1c] sm:$0xf]
          %v360 = vld [vmem:[#allocation2 + $0x20] sm:$0xf]
          %v361 = vld [vmem:[#allocation2 + $0x24] sm:$0xf]
          %v362 = vld [vmem:[#allocation2 + $0x28] sm:$0xf]
          %v363 = vld [vmem:[#allocation2 + $0x2c] sm:$0xf]
          %v364 = vld [vmem:[#allocation2 + $0x30] sm:$0xf]
          %v365 = vld [vmem:[#allocation2 + $0x34] sm:$0xf]
          %v366 = vld [vmem:[#allocation2 + $0x38] sm:$0xf]
          %v367 = vld [vmem:[#allocation2 + $0x3c] sm:$0xf]
          %v368 = vld [vmem:[%s280] sm:$0xf]
          %v369 = vld [vmem:[%s280 + $0x4] sm:$0xf]
          %v370 = vld [vmem:[%s280 + $0x8] sm:$0xf]
          %v371 = vld [vmem:[%s280 + $0xc] sm:$0xf]
          %v372 = vld [vmem:[%s280 + $0x10] sm:$0xf]
          %v373 = vld [vmem:[%s280 + $0x14] sm:$0xf]
          %v374 = vld [vmem:[%s280 + $0x18] sm:$0xf]
          %v375 = vld [vmem:[%s280 + $0x1c] sm:$0xf]
          %v376 = vld [vmem:[%s280 + $0x20] sm:$0xf]
          %v377 = vld [vmem:[%s280 + $0x24] sm:$0xf]
          %v378 = vld [vmem:[%s280 + $0x28] sm:$0xf]
          %v379 = vld [vmem:[%s280 + $0x2c] sm:$0xf]
          %v380 = vld [vmem:[%s280 + $0x30] sm:$0xf]
          %v381 = vld [vmem:[%s280 + $0x34] sm:$0xf]
          %v382 = vld [vmem:[%s280 + $0x38] sm:$0xf]
          %v383 = vld [vmem:[%s280 + $0x3c] sm:$0xf]
          %v400 = vunpack.c.l.b16 %v352
          %v401 = vunpack.c.l.b16 %v353
          %v402 = vunpack.c.l.b16 %v354
          %v403 = vunpack.c.l.b16 %v355
          %v404 = vunpack.c.l.b16 %v356
          %v405 = vunpack.c.l.b16 %v357
          %v406 = vunpack.c.l.b16 %v358
          %v407 = vunpack.c.l.b16 %v359
          %v408 = vunpack.c.l.b16 %v360
          %v409 = vunpack.c.l.b16 %v361
          %v410 = vunpack.c.l.b16 %v362
          %v411 = vunpack.c.l.b16 %v363
          %v412 = vunpack.c.l.b16 %v364
          %v413 = vunpack.c.l.b16 %v365
          %v414 = vunpack.c.l.b16 %v366
          %v415 = vunpack.c.l.b16 %v367
          %v416 = vpack.c.b16 %v401, %v400
          %v417 = vpack.c.b16 %v403, %v402
          %v418 = vpack.c.b16 %v405, %v404
          %v419 = vpack.c.b16 %v407, %v406
          %v420 = vpack.c.b16 %v409, %v408
          %v421 = vpack.c.b16 %v411, %v410
          %v422 = vpack.c.b16 %v413, %v412
          %v423 = vpack.c.b16 %v415, %v414
          %v448 = vunpack.c.l.b16 %v368
          %v449 = vunpack.c.l.b16 %v369
          %v450 = vunpack.c.l.b16 %v370
          %v451 = vunpack.c.l.b16 %v371
          %v452 = vunpack.c.l.b16 %v372
          %v453 = vunpack.c.l.b16 %v373
          %v454 = vunpack.c.l.b16 %v374
          %v455 = vunpack.c.l.b16 %v375
          %v456 = vunpack.c.l.b16 %v376
          %v457 = vunpack.c.l.b16 %v377
          %v458 = vunpack.c.l.b16 %v378
          %v459 = vunpack.c.l.b16 %v379
          %v460 = vunpack.c.l.b16 %v380
          %v461 = vunpack.c.l.b16 %v381
          %v462 = vunpack.c.l.b16 %v382
          %v463 = vunpack.c.l.b16 %v383
          %v464 = vpack.c.b16 %v449, %v448
          %v465 = vpack.c.b16 %v451, %v450
          %v466 = vpack.c.b16 %v453, %v452
          %v467 = vpack.c.b16 %v455, %v454
          %v468 = vpack.c.b16 %v457, %v456
          %v469 = vpack.c.b16 %v459, %v458
          %v470 = vpack.c.b16 %v461, %v460
          %v471 = vpack.c.b16 %v463, %v462
          %480 = vmatprep.subr.bf16.mxu0 0
          %481 = vmatpush1.bf16.msra.mxu0 %v471
          %482 = vmatprep.subr.bf16.mxu0 0
          %483 = vmatpush1.bf16.msra.mxu0 %v470
          %484 = vmatprep.subr.bf16.mxu0 0
          %485 = vmatpush1.bf16.msra.mxu0 %v469
          %486 = vmatprep.subr.bf16.mxu0 0
          %487 = vmatpush1.bf16.msra.mxu0 %v468
          %488 = vmatprep.subr.bf16.mxu0 0
          %489 = vmatpush1.bf16.msra.mxu0 %v467
          %490 = vmatprep.subr.bf16.mxu0 0
          %491 = vmatpush1.bf16.msra.mxu0 %v466
          %492 = vmatprep.subr.bf16.mxu0 0
          %493 = vmatpush1.bf16.msra.mxu0 %v465
          %494 = vmatprep.subr.bf16.mxu0 0
          %495 = vmatpush1.bf16.msra.mxu0 %v464
          %496 = vmatprep.subr.bf16.mxu0 0
          %497 = vmatpush2.bf16.msra.mxu0 0
          %498 = vmatprep.subr.bf16.mxu0 0
          %499 = vmatpush2.bf16.msra.mxu0 0
          %500 = vmatprep.subr.bf16.mxu0 0
          %501 = vmatpush2.bf16.msra.mxu0 0
          %502 = vmatprep.subr.bf16.mxu0 0
          %503 = vmatpush2.bf16.msra.mxu0 0
          %504 = vmatprep.subr.bf16.mxu0 0
          %505 = vmatpush2.bf16.msra.mxu0 0
          %506 = vmatprep.subr.bf16.mxu0 0
          %507 = vmatpush2.bf16.msra.mxu0 0
          %508 = vmatprep.subr.bf16.mxu0 0
          %509 = vmatpush2.bf16.msra.mxu0 0
          %510 = vmatprep.subr.bf16.mxu0 0
          %511 = vmatpush2.bf16.msra.mxu0 0
          %512 = vmatprep.mubr.bf16.mxu0 0
          %513 = vmatmul.mubr.bf16.gmra.mxu0 %v416
          %v514 = vpop.f32.mrf.mxu0
          %v515 = vadd.f32 0.0, %v514
          %v516 = vpop.f32.mrf.mxu0
          %v517 = vpop.f32.mrf.mxu0
          %v518 = vadd.f32 0.0, %v517
          %v519 = vpop.f32.mrf.mxu0
          %520 = vmatprep.mubr.bf16.mxu0 0
          %521 = vmatmul.mubr.bf16.gmra.mxu0 %v417
          %v522 = vpop.f32.mrf.mxu0
          %v523 = vadd.f32 0.0, %v522
          %v524 = vpop.f32.mrf.mxu0
          %v525 = vpop.f32.mrf.mxu0
          %v526 = vadd.f32 0.0, %v525
          %v527 = vpop.f32.mrf.mxu0
          %528 = vmatprep.mubr.bf16.mxu0 0
          %529 = vmatmul.mubr.bf16.gmra.mxu0 %v418
          %v530 = vpop.f32.mrf.mxu0
          %v531 = vadd.f32 0.0, %v530
          %v532 = vpop.f32.mrf.mxu0
          %v533 = vpop.f32.mrf.mxu0
          %v534 = vadd.f32 0.0, %v533
          %v535 = vpop.f32.mrf.mxu0
          %536 = vmatprep.mubr.bf16.mxu0 0
          %537 = vmatmul.mubr.bf16.gmra.mxu0 %v419
          %v538 = vpop.f32.mrf.mxu0
          %v539 = vadd.f32 0.0, %v538
          %v540 = vpop.f32.mrf.mxu0
          %v541 = vpop.f32.mrf.mxu0
          %v542 = vadd.f32 0.0, %v541
          %v543 = vpop.f32.mrf.mxu0
          %544 = vmatprep.mubr.bf16.mxu0 0
          %545 = vmatmul.mubr.bf16.gmra.mxu0 %v420
          %v546 = vpop.f32.mrf.mxu0
          %v547 = vadd.f32 0.0, %v546
          %v548 = vpop.f32.mrf.mxu0
          %v549 = vpop.f32.mrf.mxu0
          %v550 = vadd.f32 0.0, %v549
          %v551 = vpop.f32.mrf.mxu0
          %552 = vmatprep.mubr.bf16.mxu0 0
          %553 = vmatmul.mubr.bf16.gmra.mxu0 %v421
          %v554 = vpop.f32.mrf.mxu0
          %v555 = vadd.f32 0.0, %v554
          %v556 = vpop.f32.mrf.mxu0
          %v557 = vpop.f32.mrf.mxu0
          %v558 = vadd.f32 0.0, %v557
          %v559 = vpop.f32.mrf.mxu0
          %560 = vmatprep.mubr.bf16.mxu0 0
          %561 = vmatmul.mubr.bf16.gmra.mxu0 %v422
          %v562 = vpop.f32.mrf.mxu0
          %v563 = vadd.f32 0.0, %v562
          %v564 = vpop.f32.mrf.mxu0
          %v565 = vpop.f32.mrf.mxu0
          %v566 = vadd.f32 0.0, %v565
          %v567 = vpop.f32.mrf.mxu0
          %568 = vmatprep.mubr.bf16.mxu0 0
          %569 = vmatmul.mubr.bf16.gmra.mxu0 %v423
          %v570 = vpop.f32.mrf.mxu0
          %v571 = vadd.f32 0.0, %v570
          %v572 = vpop.f32.mrf.mxu0
          %v573 = vpop.f32.mrf.mxu0
          %v574 = vadd.f32 0.0, %v573
          %v575 = vpop.f32.mrf.mxu0
          %576 = vdwg.mxu0
          %v577 = vpack.c.bf16 %v518, %v515
          %v578 = vpack.c.bf16 %v526, %v523
          %v579 = vpack.c.bf16 %v534, %v531
          %v580 = vpack.c.bf16 %v542, %v539
          %v581 = vpack.c.bf16 %v550, %v547
          %v582 = vpack.c.bf16 %v558, %v555
          %v583 = vpack.c.bf16 %v566, %v563
          %v584 = vpack.c.bf16 %v574, %v571
          %v593 = vunpack.c.l.b16 %v577
          %v594 = vunpack.c.h.b16 %v577
          %v595 = vunpack.c.l.b16 %v578
          %v596 = vunpack.c.h.b16 %v578
          %v597 = vunpack.c.l.b16 %v579
          %v598 = vunpack.c.h.b16 %v579
          %v599 = vunpack.c.l.b16 %v580
          %v600 = vunpack.c.h.b16 %v580
          %v601 = vunpack.c.l.b16 %v581
          %v602 = vunpack.c.h.b16 %v581
          %v603 = vunpack.c.l.b16 %v582
          %v604 = vunpack.c.h.b16 %v582
          %v605 = vunpack.c.l.b16 %v583
          %v606 = vunpack.c.h.b16 %v583
          %v607 = vunpack.c.l.b16 %v584
          %v608 = vunpack.c.h.b16 %v584
          %v609 = vpack.c.b16 %v593, %v593
          %v610 = vpack.c.b16 %v594, %v594
          %v611 = vpack.c.b16 %v595, %v595
          %v612 = vpack.c.b16 %v596, %v596
          %v613 = vpack.c.b16 %v597, %v597
          %v614 = vpack.c.b16 %v598, %v598
          %v615 = vpack.c.b16 %v599, %v599
          %v616 = vpack.c.b16 %v600, %v600
          %v617 = vpack.c.b16 %v601, %v601
          %v618 = vpack.c.b16 %v602, %v602
          %v619 = vpack.c.b16 %v603, %v603
          %v620 = vpack.c.b16 %v604, %v604
          %v621 = vpack.c.b16 %v605, %v605
          %v622 = vpack.c.b16 %v606, %v606
          %v623 = vpack.c.b16 %v607, %v607
          %v624 = vpack.c.b16 %v608, %v608
          %641 = vst [vmem:[#allocation3] sm:$0xf] %v609
          %642 = vst [vmem:[#allocation3 + $0x4] sm:$0xf] %v610
          %643 = vst [vmem:[#allocation3 + $0x8] sm:$0xf] %v611
          %644 = vst [vmem:[#allocation3 + $0xc] sm:$0xf] %v612
          %645 = vst [vmem:[#allocation3 + $0x10] sm:$0xf] %v613
          %646 = vst [vmem:[#allocation3 + $0x14] sm:$0xf] %v614
          %647 = vst [vmem:[#allocation3 + $0x18] sm:$0xf] %v615
          %648 = vst [vmem:[#allocation3 + $0x1c] sm:$0xf] %v616
          %649 = vst [vmem:[#allocation3 + $0x20] sm:$0xf] %v617
          %650 = vst [vmem:[#allocation3 + $0x24] sm:$0xf] %v618
          %651 = vst [vmem:[#allocation3 + $0x28] sm:$0xf] %v619
          %652 = vst [vmem:[#allocation3 + $0x2c] sm:$0xf] %v620
          %653 = vst [vmem:[#allocation3 + $0x30] sm:$0xf] %v621
          %654 = vst [vmem:[#allocation3 + $0x34] sm:$0xf] %v622
          %655 = vst [vmem:[#allocation3 + $0x38] sm:$0xf] %v623
          %656 = vst [vmem:[#allocation3 + $0x3c] sm:$0xf] %v624
        $region60: #{tpu_custom_call.1} parent=39 // pred_fallthru
          _
        %s657 = smul.u32 %s25, 128
        %s658 = sshra.s32 %s657, 3
        %s659 = sand.u32 %s657, 7
        %s660 = smul.addr %s658, 4
        %s661 = scalar_lea.vmem [#allocation3], %s660
        %v662 = vld [vmem:[%s661] sm:$0xf]
        %v663 = vld [vmem:[%s661 + $0x4] sm:$0xf]
        %v664 = vld [vmem:[%s661 + $0x8] sm:$0xf]
        %v665 = vld [vmem:[%s661 + $0xc] sm:$0xf]
        %v666 = vld [vmem:[%s661 + $0x10] sm:$0xf]
        %v667 = vld [vmem:[%s661 + $0x14] sm:$0xf]
        %v668 = vld [vmem:[%s661 + $0x18] sm:$0xf]
        %v669 = vld [vmem:[%s661 + $0x1c] sm:$0xf]
        %v670 = vld [vmem:[%s661 + $0x20] sm:$0xf]
        %v671 = vld [vmem:[%s661 + $0x24] sm:$0xf]
        %v672 = vld [vmem:[%s661 + $0x28] sm:$0xf]
        %v673 = vld [vmem:[%s661 + $0x2c] sm:$0xf]
        %v674 = vld [vmem:[%s661 + $0x30] sm:$0xf]
        %v675 = vld [vmem:[%s661 + $0x34] sm:$0xf]
        %v676 = vld [vmem:[%s661 + $0x38] sm:$0xf]
        %v677 = vld [vmem:[%s661 + $0x3c] sm:$0xf]
        %v678 = vunpack.c.l.bf16 %v662
        %v679 = vunpack.c.l.bf16 %v663
        %v680 = vunpack.c.l.bf16 %v664
        %v681 = vunpack.c.l.bf16 %v665
        %v682 = vunpack.c.l.bf16 %v666
        %v683 = vunpack.c.l.bf16 %v667
        %v684 = vunpack.c.l.bf16 %v668
        %v685 = vunpack.c.l.bf16 %v669
        %v686 = vunpack.c.l.bf16 %v670
        %v687 = vunpack.c.l.bf16 %v671
        %v688 = vunpack.c.l.bf16 %v672
        %v689 = vunpack.c.l.bf16 %v673
        %v690 = vunpack.c.l.bf16 %v674
        %v691 = vunpack.c.l.bf16 %v675
        %v692 = vunpack.c.l.bf16 %v676
        %v693 = vunpack.c.l.bf16 %v677
        %v694 = vld [vmem:[#allocation9] sm:$0xf]
        %v695 = vld [vmem:[#allocation9 + $0x4] sm:$0xf]
        %v696 = vld [vmem:[#allocation9 + $0x8] sm:$0xf]
        %v697 = vld [vmem:[#allocation9 + $0xc] sm:$0xf]
        %v698 = vld [vmem:[#allocation9 + $0x10] sm:$0xf]
        %v699 = vld [vmem:[#allocation9 + $0x14] sm:$0xf]
        %v700 = vld [vmem:[#allocation9 + $0x18] sm:$0xf]
        %v701 = vld [vmem:[#allocation9 + $0x1c] sm:$0xf]
        %v702 = vld [vmem:[#allocation9 + $0x20] sm:$0xf]
        %v703 = vld [vmem:[#allocation9 + $0x24] sm:$0xf]
        %v704 = vld [vmem:[#allocation9 + $0x28] sm:$0xf]
        %v705 = vld [vmem:[#allocation9 + $0x2c] sm:$0xf]
        %v706 = vld [vmem:[#allocation9 + $0x30] sm:$0xf]
        %v707 = vld [vmem:[#allocation9 + $0x34] sm:$0xf]
        %v708 = vld [vmem:[#allocation9 + $0x38] sm:$0xf]
        %v709 = vld [vmem:[#allocation9 + $0x3c] sm:$0xf]
        %v710 = vld [vmem:[#allocation3] sm:$0xf]
        %v711 = vld [vmem:[#allocation3 + $0x4] sm:$0xf]
        %v712 = vld [vmem:[#allocation3 + $0x8] sm:$0xf]
        %v713 = vld [vmem:[#allocation3 + $0xc] sm:$0xf]
        %v714 = vld [vmem:[#allocation3 + $0x10] sm:$0xf]
        %v715 = vld [vmem:[#allocation3 + $0x14] sm:$0xf]
        %v716 = vld [vmem:[#allocation3 + $0x18] sm:$0xf]
        %v717 = vld [vmem:[#allocation3 + $0x1c] sm:$0xf]
        %v718 = vld [vmem:[#allocation3 + $0x20] sm:$0xf]
        %v719 = vld [vmem:[#allocation3 + $0x24] sm:$0xf]
        %v720 = vld [vmem:[#allocation3 + $0x28] sm:$0xf]
        %v721 = vld [vmem:[#allocation3 + $0x2c] sm:$0xf]
        %v722 = vld [vmem:[#allocation3 + $0x30] sm:$0xf]
        %v723 = vld [vmem:[#allocation3 + $0x34] sm:$0xf]
        %v724 = vld [vmem:[#allocation3 + $0x38] sm:$0xf]
        %v725 = vld [vmem:[#allocation3 + $0x3c] sm:$0xf]
        %v742 = vunpack.c.l.b16 %v694
        %v743 = vunpack.c.l.b16 %v695
        %v744 = vunpack.c.l.b16 %v696
        %v745 = vunpack.c.l.b16 %v697
        %v746 = vunpack.c.l.b16 %v698
        %v747 = vunpack.c.l.b16 %v699
        %v748 = vunpack.c.l.b16 %v700
        %v749 = vunpack.c.l.b16 %v701
        %v750 = vunpack.c.l.b16 %v702
        %v751 = vunpack.c.l.b16 %v703
        %v752 = vunpack.c.l.b16 %v704
        %v753 = vunpack.c.l.b16 %v705
        %v754 = vunpack.c.l.b16 %v706
        %v755 = vunpack.c.l.b16 %v707
        %v756 = vunpack.c.l.b16 %v708
        %v757 = vunpack.c.l.b16 %v709
        %v758 = vpack.c.b16 %v743, %v742
        %v759 = vpack.c.b16 %v745, %v744
        %v760 = vpack.c.b16 %v747, %v746
        %v761 = vpack.c.b16 %v749, %v748
        %v762 = vpack.c.b16 %v751, %v750
        %v763 = vpack.c.b16 %v753, %v752
        %v764 = vpack.c.b16 %v755, %v754
        %v765 = vpack.c.b16 %v757, %v756
        %v790 = vunpack.c.l.b16 %v710
        %v791 = vunpack.c.l.b16 %v711
        %v792 = vunpack.c.l.b16 %v712
        %v793 = vunpack.c.l.b16 %v713
        %v794 = vunpack.c.l.b16 %v714
        %v795 = vunpack.c.l.b16 %v715
        %v796 = vunpack.c.l.b16 %v716
        %v797 = vunpack.c.l.b16 %v717
        %v798 = vunpack.c.l.b16 %v718
        %v799 = vunpack.c.l.b16 %v719
        %v800 = vunpack.c.l.b16 %v720
        %v801 = vunpack.c.l.b16 %v721
        %v802 = vunpack.c.l.b16 %v722
        %v803 = vunpack.c.l.b16 %v723
        %v804 = vunpack.c.l.b16 %v724
        %v805 = vunpack.c.l.b16 %v725
        %v806 = vpack.c.b16 %v791, %v790
        %v807 = vpack.c.b16 %v793, %v792
        %v808 = vpack.c.b16 %v795, %v794
        %v809 = vpack.c.b16 %v797, %v796
        %v810 = vpack.c.b16 %v799, %v798
        %v811 = vpack.c.b16 %v801, %v800
        %v812 = vpack.c.b16 %v803, %v802
        %v813 = vpack.c.b16 %v805, %v804
        %822 = vmatprep.subr.bf16.mxu0 0
        %823 = vmatpush1.bf16.msra.mxu0 %v813
        %824 = vmatprep.subr.bf16.mxu0 0
        %825 = vmatpush1.bf16.msra.mxu0 %v812
        %826 = vmatprep.subr.bf16.mxu0 0
        %827 = vmatpush1.bf16.msra.mxu0 %v811
        %828 = vmatprep.subr.bf16.mxu0 0
        %829 = vmatpush1.bf16.msra.mxu0 %v810
        %830 = vmatprep.subr.bf16.mxu0 0
        %831 = vmatpush1.bf16.msra.mxu0 %v809
        %832 = vmatprep.subr.bf16.mxu0 0
        %833 = vmatpush1.bf16.msra.mxu0 %v808
        %834 = vmatprep.subr.bf16.mxu0 0
        %835 = vmatpush1.bf16.msra.mxu0 %v807
        %836 = vmatprep.subr.bf16.mxu0 0
        %837 = vmatpush1.bf16.msra.mxu0 %v806
        %838 = vmatprep.subr.bf16.mxu0 0
        %839 = vmatpush2.bf16.msra.mxu0 0
        %840 = vmatprep.subr.bf16.mxu0 0
        %841 = vmatpush2.bf16.msra.mxu0 0
        %842 = vmatprep.subr.bf16.mxu0 0
        %843 = vmatpush2.bf16.msra.mxu0 0
        %844 = vmatprep.subr.bf16.mxu0 0
        %845 = vmatpush2.bf16.msra.mxu0 0
        %846 = vmatprep.subr.bf16.mxu0 0
        %847 = vmatpush2.bf16.msra.mxu0 0
        %848 = vmatprep.subr.bf16.mxu0 0
        %849 = vmatpush2.bf16.msra.mxu0 0
        %850 = vmatprep.subr.bf16.mxu0 0
        %851 = vmatpush2.bf16.msra.mxu0 0
        %852 = vmatprep.subr.bf16.mxu0 0
        %853 = vmatpush2.bf16.msra.mxu0 0
        %854 = vmatprep.mubr.bf16.mxu0 0
        %855 = vmatmul.mubr.bf16.gmra.mxu0 %v758
        %v856 = vpop.f32.mrf.mxu0
        %v857 = vadd.f32 0.0, %v856
        %v858 = vpop.f32.mrf.mxu0
        %v859 = vpop.f32.mrf.mxu0
        %v860 = vadd.f32 0.0, %v859
        %v861 = vpop.f32.mrf.mxu0
        %862 = vmatprep.mubr.bf16.mxu0 0
        %863 = vmatmul.mubr.bf16.gmra.mxu0 %v759
        %v864 = vpop.f32.mrf.mxu0
        %v865 = vadd.f32 0.0, %v864
        %v866 = vpop.f32.mrf.mxu0
        %v867 = vpop.f32.mrf.mxu0
        %v868 = vadd.f32 0.0, %v867
        %v869 = vpop.f32.mrf.mxu0
        %870 = vmatprep.mubr.bf16.mxu0 0
        %871 = vmatmul.mubr.bf16.gmra.mxu0 %v760
        %v872 = vpop.f32.mrf.mxu0
        %v873 = vadd.f32 0.0, %v872
        %v874 = vpop.f32.mrf.mxu0
        %v875 = vpop.f32.mrf.mxu0
        %v876 = vadd.f32 0.0, %v875
        %v877 = vpop.f32.mrf.mxu0
        %878 = vmatprep.mubr.bf16.mxu0 0
        %879 = vmatmul.mubr.bf16.gmra.mxu0 %v761
        %v880 = vpop.f32.mrf.mxu0
        %v881 = vadd.f32 0.0, %v880
        %v882 = vpop.f32.mrf.mxu0
        %v883 = vpop.f32.mrf.mxu0
        %v884 = vadd.f32 0.0, %v883
        %v885 = vpop.f32.mrf.mxu0
        %886 = vmatprep.mubr.bf16.mxu0 0
        %887 = vmatmul.mubr.bf16.gmra.mxu0 %v762
        %v888 = vpop.f32.mrf.mxu0
        %v889 = vadd.f32 0.0, %v888
        %v890 = vpop.f32.mrf.mxu0
        %v891 = vpop.f32.mrf.mxu0
        %v892 = vadd.f32 0.0, %v891
        %v893 = vpop.f32.mrf.mxu0
        %894 = vmatprep.mubr.bf16.mxu0 0
        %895 = vmatmul.mubr.bf16.gmra.mxu0 %v763
        %v896 = vpop.f32.mrf.mxu0
        %v897 = vadd.f32 0.0, %v896
        %v898 = vpop.f32.mrf.mxu0
        %v899 = vpop.f32.mrf.mxu0
        %v900 = vadd.f32 0.0, %v899
        %v901 = vpop.f32.mrf.mxu0
        %902 = vmatprep.mubr.bf16.mxu0 0
        %903 = vmatmul.mubr.bf16.gmra.mxu0 %v764
        %v904 = vpop.f32.mrf.mxu0
        %v905 = vadd.f32 0.0, %v904
        %v906 = vpop.f32.mrf.mxu0
        %v907 = vpop.f32.mrf.mxu0
        %v908 = vadd.f32 0.0, %v907
        %v909 = vpop.f32.mrf.mxu0
        %910 = vmatprep.mubr.bf16.mxu0 0
        %911 = vmatmul.mubr.bf16.gmra.mxu0 %v765
        %v912 = vpop.f32.mrf.mxu0
        %v913 = vadd.f32 0.0, %v912
        %v914 = vpop.f32.mrf.mxu0
        %v915 = vpop.f32.mrf.mxu0
        %v916 = vadd.f32 0.0, %v915
        %v917 = vpop.f32.mrf.mxu0
        %918 = vdwg.mxu0
        %s919 = sld [smem:[#allocation4 + %s24]]
        %s920 = sadd.f32 %s919, 1.0
        %v921 = vstv %s920
        %v922 = vmul.f32 %v921, %v678
        %v923 = vmul.f32 %v921, %v679
        %v924 = vmul.f32 %v921, %v680
        %v925 = vmul.f32 %v921, %v681
        %v926 = vmul.f32 %v921, %v682
        %v927 = vmul.f32 %v921, %v683
        %v928 = vmul.f32 %v921, %v684
        %v929 = vmul.f32 %v921, %v685
        %v930 = vmul.f32 %v921, %v686
        %v931 = vmul.f32 %v921, %v687
        %v932 = vmul.f32 %v921, %v688
        %v933 = vmul.f32 %v921, %v689
        %v934 = vmul.f32 %v921, %v690
        %v935 = vmul.f32 %v921, %v691
        %v936 = vmul.f32 %v921, %v692
        %v937 = vmul.f32 %v921, %v693
        %v938 = vadd.f32 %v922, %v857
        %v939 = vadd.f32 %v923, %v860
        %v940 = vadd.f32 %v924, %v865
        %v941 = vadd.f32 %v925, %v868
        %v942 = vadd.f32 %v926, %v873
        %v943 = vadd.f32 %v927, %v876
        %v944 = vadd.f32 %v928, %v881
        %v945 = vadd.f32 %v929, %v884
        %v946 = vadd.f32 %v930, %v889
        %v947 = vadd.f32 %v931, %v892
        %v948 = vadd.f32 %v932, %v897
        %v949 = vadd.f32 %v933, %v900
        %v950 = vadd.f32 %v934, %v905
        %v951 = vadd.f32 %v935, %v908
        %v952 = vadd.f32 %v936, %v913
        %v953 = vadd.f32 %v937, %v916
        %v954 = vld [vmem:[%s309] sm:$0x1]
        %v956 = vlaneseq
        %v957 = vshrl.u32 %v956, 7
        %v958 = vsub.s32 0, %v957
        %v959 = vrot.slane %v954, %v958
        %v961 = vadd.f32 %v938, %v959
        %v962 = vadd.f32 %v939, %v959
        %v963 = vadd.f32 %v940, %v959
        %v964 = vadd.f32 %v941, %v959
        %v965 = vadd.f32 %v942, %v959
        %v966 = vadd.f32 %v943, %v959
        %v967 = vadd.f32 %v944, %v959
        %v968 = vadd.f32 %v945, %v959
        %v969 = vadd.f32 %v946, %v959
        %v970 = vadd.f32 %v947, %v959
        %v971 = vadd.f32 %v948, %v959
        %v972 = vadd.f32 %v949, %v959
        %v973 = vadd.f32 %v950, %v959
        %v974 = vadd.f32 %v951, %v959
        %v975 = vadd.f32 %v952, %v959
        %v976 = vadd.f32 %v953, %v959
        %p977 = scmp.lt.s32.totalorder %s24, 2
        // Predicated region
        $region65: #{tpu_custom_call.1} parent=39 // pred_check
          %p978 = pneg %p977
        $region66: #{tpu_custom_call.1} parent=39 // pred_check_branch
          %980 = sbr.rel (%p978) target = $region68
        $region67: #{tpu_custom_call.1} parent=39 // pred_region
          %v981 = vmax.f32 %v961, 0.0
          %v982 = vmax.f32 %v962, 0.0
          %v983 = vmax.f32 %v963, 0.0
          %v984 = vmax.f32 %v964, 0.0
          %v985 = vmax.f32 %v965, 0.0
          %v986 = vmax.f32 %v966, 0.0
          %v987 = vmax.f32 %v967, 0.0
          %v988 = vmax.f32 %v968, 0.0
          %v989 = vmax.f32 %v969, 0.0
          %v990 = vmax.f32 %v970, 0.0
          %v991 = vmax.f32 %v971, 0.0
          %v992 = vmax.f32 %v972, 0.0
          %v993 = vmax.f32 %v973, 0.0
          %v994 = vmax.f32 %v974, 0.0
          %v995 = vmax.f32 %v975, 0.0
          %v996 = vmax.f32 %v976, 0.0
          %v997 = vpack.c.bf16 %v982, %v981
          %v998 = vpack.c.bf16 %v984, %v983
          %v999 = vpack.c.bf16 %v986, %v985
          %v1000 = vpack.c.bf16 %v988, %v987
          %v1001 = vpack.c.bf16 %v990, %v989
          %v1002 = vpack.c.bf16 %v992, %v991
          %v1003 = vpack.c.bf16 %v994, %v993
          %v1004 = vpack.c.bf16 %v996, %v995
          %v1013 = vunpack.c.l.b16 %v997
          %v1014 = vunpack.c.h.b16 %v997
          %v1015 = vunpack.c.l.b16 %v998
          %v1016 = vunpack.c.h.b16 %v998
          %v1017 = vunpack.c.l.b16 %v999
          %v1018 = vunpack.c.h.b16 %v999
          %v1019 = vunpack.c.l.b16 %v1000
          %v1020 = vunpack.c.h.b16 %v1000
          %v1021 = vunpack.c.l.b16 %v1001
          %v1022 = vunpack.c.h.b16 %v1001
          %v1023 = vunpack.c.l.b16 %v1002
          %v1024 = vunpack.c.h.b16 %v1002
          %v1025 = vunpack.c.l.b16 %v1003
          %v1026 = vunpack.c.h.b16 %v1003
          %v1027 = vunpack.c.l.b16 %v1004
          %v1028 = vunpack.c.h.b16 %v1004
          %v1029 = vpack.c.b16 %v1013, %v1013
          %v1030 = vpack.c.b16 %v1014, %v1014
          %v1031 = vpack.c.b16 %v1015, %v1015
          %v1032 = vpack.c.b16 %v1016, %v1016
          %v1033 = vpack.c.b16 %v1017, %v1017
          %v1034 = vpack.c.b16 %v1018, %v1018
          %v1035 = vpack.c.b16 %v1019, %v1019
          %v1036 = vpack.c.b16 %v1020, %v1020
          %v1037 = vpack.c.b16 %v1021, %v1021
          %v1038 = vpack.c.b16 %v1022, %v1022
          %v1039 = vpack.c.b16 %v1023, %v1023
          %v1040 = vpack.c.b16 %v1024, %v1024
          %v1041 = vpack.c.b16 %v1025, %v1025
          %v1042 = vpack.c.b16 %v1026, %v1026
          %v1043 = vpack.c.b16 %v1027, %v1027
          %v1044 = vpack.c.b16 %v1028, %v1028
          %s1061 = smul.addr %s658, 4
          %s1062 = scalar_lea.vmem [#allocation2], %s1061
          %1063 = vst [vmem:[%s1062] sm:$0xf] %v1029
          %1064 = vst [vmem:[%s1062 + $0x4] sm:$0xf] %v1030
          %1065 = vst [vmem:[%s1062 + $0x8] sm:$0xf] %v1031
          %1066 = vst [vmem:[%s1062 + $0xc] sm:$0xf] %v1032
          %1067 = vst [vmem:[%s1062 + $0x10] sm:$0xf] %v1033
          %1068 = vst [vmem:[%s1062 + $0x14] sm:$0xf] %v1034
          %1069 = vst [vmem:[%s1062 + $0x18] sm:$0xf] %v1035
          %1070 = vst [vmem:[%s1062 + $0x1c] sm:$0xf] %v1036
          %1071 = vst [vmem:[%s1062 + $0x20] sm:$0xf] %v1037
          %1072 = vst [vmem:[%s1062 + $0x24] sm:$0xf] %v1038
          %1073 = vst [vmem:[%s1062 + $0x28] sm:$0xf] %v1039
          %1074 = vst [vmem:[%s1062 + $0x2c] sm:$0xf] %v1040
          %1075 = vst [vmem:[%s1062 + $0x30] sm:$0xf] %v1041
          %1076 = vst [vmem:[%s1062 + $0x34] sm:$0xf] %v1042
          %1077 = vst [vmem:[%s1062 + $0x38] sm:$0xf] %v1043
          %1078 = vst [vmem:[%s1062 + $0x3c] sm:$0xf] %v1044
          %1079 = vst [vmem:[#allocation12] sm:$0xff] %v981
          %1080 = vst [vmem:[#allocation12 + $0x8] sm:$0xff] %v982
          %1081 = vst [vmem:[#allocation12 + $0x10] sm:$0xff] %v983
          %1082 = vst [vmem:[#allocation12 + $0x18] sm:$0xff] %v984
          %1083 = vst [vmem:[#allocation12 + $0x20] sm:$0xff] %v985
          %1084 = vst [vmem:[#allocation12 + $0x28] sm:$0xff] %v986
          %1085 = vst [vmem:[#allocation12 + $0x30] sm:$0xff] %v987
          %1086 = vst [vmem:[#allocation12 + $0x38] sm:$0xff] %v988
          %1087 = vst [vmem:[#allocation12 + $0x40] sm:$0xff] %v989
          %1088 = vst [vmem:[#allocation12 + $0x48] sm:$0xff] %v990
          %1089 = vst [vmem:[#allocation12 + $0x50] sm:$0xff] %v991
          %1090 = vst [vmem:[#allocation12 + $0x58] sm:$0xff] %v992
          %1091 = vst [vmem:[#allocation12 + $0x60] sm:$0xff] %v993
          %1092 = vst [vmem:[#allocation12 + $0x68] sm:$0xff] %v994
          %1093 = vst [vmem:[#allocation12 + $0x70] sm:$0xff] %v995
          %1094 = vst [vmem:[#allocation12 + $0x78] sm:$0xff] %v996
        $region68: #{tpu_custom_call.1} parent=39 // pred_fallthru
          _
        %p1095 = scmp.eq.s32.totalorder %s24, 2
        // Predicated region
        $region69: #{tpu_custom_call.1} parent=39 // pred_check
          %p1096 = pneg %p1095
        $region70: #{tpu_custom_call.1} parent=39 // pred_check_branch
          %1098 = sbr.rel (%p1096) target = $region72
        $region71: #{tpu_custom_call.1} parent=39 // pred_region
          %v1099 = vlaneseq
          %v1100 = vand.u32 %v1099, 127
          %vm1101 = vcmp.lt.s32.totalorder %v1100, 8
          %v1102 = vsel %vm1101, %v961, -1e+30
          %v1103 = vsel %vm1101, %v962, -1e+30
          %v1104 = vsel %vm1101, %v963, -1e+30
          %v1105 = vsel %vm1101, %v964, -1e+30
          %v1106 = vsel %vm1101, %v965, -1e+30
          %v1107 = vsel %vm1101, %v966, -1e+30
          %v1108 = vsel %vm1101, %v967, -1e+30
          %v1109 = vsel %vm1101, %v968, -1e+30
          %v1110 = vsel %vm1101, %v969, -1e+30
          %v1111 = vsel %vm1101, %v970, -1e+30
          %v1112 = vsel %vm1101, %v971, -1e+30
          %v1113 = vsel %vm1101, %v972, -1e+30
          %v1114 = vsel %vm1101, %v973, -1e+30
          %v1115 = vsel %vm1101, %v974, -1e+30
          %v1116 = vsel %vm1101, %v975, -1e+30
          %v1117 = vsel %vm1101, %v976, -1e+30
          %1118 = vmax.xlane.f32.xlu0 %v1102
          %v1119 = vpop.xlane.xlu0 %1118
          %1120 = vmax.xlane.f32.xlu0 %v1103
          %v1121 = vpop.xlane.xlu0 %1120
          %1122 = vmax.xlane.f32.xlu0 %v1104
          %v1123 = vpop.xlane.xlu0 %1122
          %1124 = vmax.xlane.f32.xlu0 %v1105
          %v1125 = vpop.xlane.xlu0 %1124
          %1126 = vmax.xlane.f32.xlu0 %v1106
          %v1127 = vpop.xlane.xlu0 %1126
          %1128 = vmax.xlane.f32.xlu0 %v1107
          %v1129 = vpop.xlane.xlu0 %1128
          %1130 = vmax.xlane.f32.xlu0 %v1108
          %v1131 = vpop.xlane.xlu0 %1130
          %1132 = vmax.xlane.f32.xlu0 %v1109
          %v1133 = vpop.xlane.xlu0 %1132
          %1134 = vmax.xlane.f32.xlu0 %v1110
          %v1135 = vpop.xlane.xlu0 %1134
          %1136 = vmax.xlane.f32.xlu0 %v1111
          %v1137 = vpop.xlane.xlu0 %1136
          %1138 = vmax.xlane.f32.xlu0 %v1112
          %v1139 = vpop.xlane.xlu0 %1138
          %1140 = vmax.xlane.f32.xlu0 %v1113
          %v1141 = vpop.xlane.xlu0 %1140
          %1142 = vmax.xlane.f32.xlu0 %v1114
          %v1143 = vpop.xlane.xlu0 %1142
          %1144 = vmax.xlane.f32.xlu0 %v1115
          %v1145 = vpop.xlane.xlu0 %1144
          %1146 = vmax.xlane.f32.xlu0 %v1116
          %v1147 = vpop.xlane.xlu0 %1146
          %1148 = vmax.xlane.f32.xlu0 %v1117
          %v1149 = vpop.xlane.xlu0 %1148
          %v1150 = vsub.f32 %v1102, %v1119
          %v1151 = vsub.f32 %v1103, %v1121
          %v1152 = vsub.f32 %v1104, %v1123
          %v1153 = vsub.f32 %v1105, %v1125
          %v1154 = vsub.f32 %v1106, %v1127
          %v1155 = vsub.f32 %v1107, %v1129
          %v1156 = vsub.f32 %v1108, %v1131
          %v1157 = vsub.f32 %v1109, %v1133
          %v1158 = vsub.f32 %v1110, %v1135
          %v1159 = vsub.f32 %v1111, %v1137
          %v1160 = vsub.f32 %v1112, %v1139
          %v1161 = vsub.f32 %v1113, %v1141
          %v1162 = vsub.f32 %v1114, %v1143
          %v1163 = vsub.f32 %v1115, %v1145
          %v1164 = vsub.f32 %v1116, %v1147
          %v1165 = vsub.f32 %v1117, %v1149
          %v1166 = vmul.f32 %v1150, 1.442695
          %v1167 = vpow.pop %v1166
          %v1168 = vmul.f32 %v1151, 1.442695
          %v1169 = vpow.pop %v1168
          %v1170 = vmul.f32 %v1152, 1.442695
          %v1171 = vpow.pop %v1170
          %v1172 = vmul.f32 %v1153, 1.442695
          %v1173 = vpow.pop %v1172
          %v1174 = vmul.f32 %v1154, 1.442695
          %v1175 = vpow.pop %v1174
          %v1176 = vmul.f32 %v1155, 1.442695
          %v1177 = vpow.pop %v1176
          %v1178 = vmul.f32 %v1156, 1.442695
          %v1179 = vpow.pop %v1178
          %v1180 = vmul.f32 %v1157, 1.442695
          %v1181 = vpow.pop %v1180
          %v1182 = vmul.f32 %v1158, 1.442695
          %v1183 = vpow.pop %v1182
          %v1184 = vmul.f32 %v1159, 1.442695
          %v1185 = vpow.pop %v1184
          %v1186 = vmul.f32 %v1160, 1.442695
          %v1187 = vpow.pop %v1186
          %v1188 = vmul.f32 %v1161, 1.442695
          %v1189 = vpow.pop %v1188
          %v1190 = vmul.f32 %v1162, 1.442695
          %v1191 = vpow.pop %v1190
          %v1192 = vmul.f32 %v1163, 1.442695
          %v1193 = vpow.pop %v1192
          %v1194 = vmul.f32 %v1164, 1.442695
          %v1195 = vpow.pop %v1194
          %v1196 = vmul.f32 %v1165, 1.442695
          %v1197 = vpow.pop %v1196
          %1198 = vadd.xlane.f32.xlu0 %v1167
          %v1199 = vpop.xlane.xlu0 %1198
          %1200 = vadd.xlane.f32.xlu0 %v1169
          %v1201 = vpop.xlane.xlu0 %1200
          %1202 = vadd.xlane.f32.xlu0 %v1171
          %v1203 = vpop.xlane.xlu0 %1202
          %1204 = vadd.xlane.f32.xlu0 %v1173
          %v1205 = vpop.xlane.xlu0 %1204
          %1206 = vadd.xlane.f32.xlu0 %v1175
          %v1207 = vpop.xlane.xlu0 %1206
          %1208 = vadd.xlane.f32.xlu0 %v1177
          %v1209 = vpop.xlane.xlu0 %1208
          %1210 = vadd.xlane.f32.xlu0 %v1179
          %v1211 = vpop.xlane.xlu0 %1210
          %1212 = vadd.xlane.f32.xlu0 %v1181
          %v1213 = vpop.xlane.xlu0 %1212
          %1214 = vadd.xlane.f32.xlu0 %v1183
          %v1215 = vpop.xlane.xlu0 %1214
          %1216 = vadd.xlane.f32.xlu0 %v1185
          %v1217 = vpop.xlane.xlu0 %1216
          %1218 = vadd.xlane.f32.xlu0 %v1187
          %v1219 = vpop.xlane.xlu0 %1218
          %1220 = vadd.xlane.f32.xlu0 %v1189
          %v1221 = vpop.xlane.xlu0 %1220
          %1222 = vadd.xlane.f32.xlu0 %v1191
          %v1223 = vpop.xlane.xlu0 %1222
          %1224 = vadd.xlane.f32.xlu0 %v1193
          %v1225 = vpop.xlane.xlu0 %1224
          %1226 = vadd.xlane.f32.xlu0 %v1195
          %v1227 = vpop.xlane.xlu0 %1226
          %1228 = vadd.xlane.f32.xlu0 %v1197
          %v1229 = vpop.xlane.xlu0 %1228
          %v1230 = vlog2.pop %v1199
          %v1231 = vmul.f32 %v1230, 0.6931472
          %v1232 = vlog2.pop %v1201
          %v1233 = vmul.f32 %v1232, 0.6931472
          %v1234 = vlog2.pop %v1203
          %v1235 = vmul.f32 %v1234, 0.6931472
          %v1236 = vlog2.pop %v1205
          %v1237 = vmul.f32 %v1236, 0.6931472
          %v1238 = vlog2.pop %v1207
          %v1239 = vmul.f32 %v1238, 0.6931472
          %v1240 = vlog2.pop %v1209
          %v1241 = vmul.f32 %v1240, 0.6931472
          %v1242 = vlog2.pop %v1211
          %v1243 = vmul.f32 %v1242, 0.6931472
          %v1244 = vlog2.pop %v1213
          %v1245 = vmul.f32 %v1244, 0.6931472
          %v1246 = vlog2.pop %v1215
          %v1247 = vmul.f32 %v1246, 0.6931472
          %v1248 = vlog2.pop %v1217
          %v1249 = vmul.f32 %v1248, 0.6931472
          %v1250 = vlog2.pop %v1219
          %v1251 = vmul.f32 %v1250, 0.6931472
          %v1252 = vlog2.pop %v1221
          %v1253 = vmul.f32 %v1252, 0.6931472
          %v1254 = vlog2.pop %v1223
          %v1255 = vmul.f32 %v1254, 0.6931472
          %v1256 = vlog2.pop %v1225
          %v1257 = vmul.f32 %v1256, 0.6931472
          %v1258 = vlog2.pop %v1227
          %v1259 = vmul.f32 %v1258, 0.6931472
          %v1260 = vlog2.pop %v1229
          %v1261 = vmul.f32 %v1260, 0.6931472
          %v1262 = vsub.f32 %v1150, %v1231
          %v1263 = vsub.f32 %v1151, %v1233
          %v1264 = vsub.f32 %v1152, %v1235
          %v1265 = vsub.f32 %v1153, %v1237
          %v1266 = vsub.f32 %v1154, %v1239
          %v1267 = vsub.f32 %v1155, %v1241
          %v1268 = vsub.f32 %v1156, %v1243
          %v1269 = vsub.f32 %v1157, %v1245
          %v1270 = vsub.f32 %v1158, %v1247
          %v1271 = vsub.f32 %v1159, %v1249
          %v1272 = vsub.f32 %v1160, %v1251
          %v1273 = vsub.f32 %v1161, %v1253
          %v1274 = vsub.f32 %v1162, %v1255
          %v1275 = vsub.f32 %v1163, %v1257
          %v1276 = vsub.f32 %v1164, %v1259
          %v1277 = vsub.f32 %v1165, %v1261
          %1278 = vst [vmem:[#allocation12] sm:$0xff] %v1262
          %1279 = vst [vmem:[#allocation12 + $0x8] sm:$0xff] %v1263
          %1280 = vst [vmem:[#allocation12 + $0x10] sm:$0xff] %v1264
          %1281 = vst [vmem:[#allocation12 + $0x18] sm:$0xff] %v1265
          %1282 = vst [vmem:[#allocation12 + $0x20] sm:$0xff] %v1266
          %1283 = vst [vmem:[#allocation12 + $0x28] sm:$0xff] %v1267
          %1284 = vst [vmem:[#allocation12 + $0x30] sm:$0xff] %v1268
          %1285 = vst [vmem:[#allocation12 + $0x38] sm:$0xff] %v1269
          %1286 = vst [vmem:[#allocation12 + $0x40] sm:$0xff] %v1270
          %1287 = vst [vmem:[#allocation12 + $0x48] sm:$0xff] %v1271
          %1288 = vst [vmem:[#allocation12 + $0x50] sm:$0xff] %v1272
          %1289 = vst [vmem:[#allocation12 + $0x58] sm:$0xff] %v1273
          %1290 = vst [vmem:[#allocation12 + $0x60] sm:$0xff] %v1274
          %1291 = vst [vmem:[#allocation12 + $0x68] sm:$0xff] %v1275
          %1292 = vst [vmem:[#allocation12 + $0x70] sm:$0xff] %v1276
          %1293 = vst [vmem:[#allocation12 + $0x78] sm:$0xff] %v1277
        $region72: #{tpu_custom_call.1} parent=39 // pred_fallthru
          _
        // Predicated region
        $region73: #{tpu_custom_call.1} parent=39 // pred_check
          %p1294 = pneg %p170
        $region74: #{tpu_custom_call.1} parent=39 // pred_check_branch
          %1296 = sbr.rel (%p1294) target = $region76
        $region75: #{tpu_custom_call.1} parent=39 // pred_region
          %s1297 = smul.u32 16, %s25
          %s1299 = ssub.s32 2048, 2048
          %1300 = vsyncadd [#allocation6], %s1299
          %s1301 = smul.addr %s1297, 128
          %s1302 = scalar_lea.hbm %s5, %s1301
          %s1303 = sshll.u32 [#allocation12], 4
          %s1304 = int_to_ptr.vmem [resolvable:$true] %s1303
          %1309 = dma.vmem_to_hbm [thread:$0]  %s1304, 2048, %s1302, [#allocation6], 128, 128, 8
        $region76: #{tpu_custom_call.1} parent=39 // pred_fallthru
          _
        // Predicated region
        $region77: #{tpu_custom_call.1} parent=39 // pred_check
          %p1310 = pneg %p170
        $region78: #{tpu_custom_call.1} parent=39 // pred_check_branch
          %1312 = sbr.rel (%p1310) target = $region80
        $region79: #{tpu_custom_call.1} parent=39 // pred_region
          %1313 = dma.done [#allocation6], 2048
        $region80: #{tpu_custom_call.1} parent=39 // pred_fallthru
          _
      $region40: #{tpu_custom_call.1} parent=5 // pred_fallthru
        _
      %p1314 = scmp.le.s32.totalorder 2, %s15
      // Predicated region
      $region81: #{tpu_custom_call.1} parent=5 // pred_check
        %p1315 = pneg %p1314
      $region82: #{tpu_custom_call.1} parent=5 // pred_check_branch
        %1317 = sbr.rel (%p1315) target = $region84
      $region83: #{tpu_custom_call.1} parent=5 // pred_region
        %s1318 = ssub.s32 %s15, 2
      $region84: #{tpu_custom_call.1} parent=5 // pred_fallthru
        _
    $region6: #{tpu_custom_call.1} parent=1 // loop_footer
      %s19 = sadd.s32 1, %s15
    $region7: #{tpu_custom_call.1} parent=1 // loop_footer_branch
      %14 = sbr.rel target = $region3
    $region8: #{tpu_custom_call.1} parent=1 // loop_exit
      _
    %1319 = vsyncpa [#allocation5], 1
    %s1320 = scalar_lea.sflag [#allocation5], 1
    %1321 = vsyncpa %s1320, 1
    %1322 = vsyncpa [#allocation10], 1
    %1323 = vsyncpa [#allocation6], 1
    %s1324 = scalar_lea.sflag [#allocation6], 1
    %1325 = vsyncpa %s1324, 1
    %1326 = vsyncpa [#allocation7], 1
    %s1327 = scalar_lea.sflag [#allocation7], 1
    %1328 = vsyncpa %s1327, 1

</llo_original>
